<compile_context>
chip_gen: v6e
topology: v6e:2x2x1
jax: 0.10.0
libtpu: 0.0.40
codegen_flags: <defaults>
</compile_context>

<pallas_src>
import jax
import jax.numpy as jnp
from jax.experimental import pallas as pl
from jax.experimental.pallas import tpu as pltpu


def _round_up(x, m):
    return ((x + m - 1) // m) * m


def pfnet_kernel(z_ref, w0_ref, b0_ref, w1_ref, b1_ref, out_ref):
    # z_ref:  (tm, dim_z)     f32 batch tile (cast to bf16 in-kernel)
    # w0_ref: (dim_z, dim_hp) bf16 (resident), b0_ref: (1, dim_hp) f32
    # w1_ref: (dim_hp, tn)    bf16 (resident), b1_ref: (1, tn)     f32
    # out_ref:(tm, tn)
    zb = z_ref[...].astype(jnp.bfloat16)          # free VPU cast, no wrapper pass

    # fc0 + ReLU (MXU bf16 x bf16 -> f32 accumulate; epilogue in f32, v5e-safe)
    h = jnp.dot(zb, w0_ref[...], preferred_element_type=jnp.float32)
    h = jnp.maximum(h + b0_ref[...], 0.0)

    # fc1 (feed MXU in bf16; keep f32 accumulation)
    y = jnp.dot(h.astype(jnp.bfloat16), w1_ref[...],
                preferred_element_type=jnp.float32)
    y = y + b1_ref[...]

    # Sigmoid via the single-transcendental tanh identity:
    #   sigmoid(y) = 0.5 + 0.5 * tanh(0.5 * y)
    # One EUP op per element; the mul/adds ride spare VALU slots.
    out_ref[...] = (0.5 + 0.5 * jnp.tanh(0.5 * y)).astype(out_ref.dtype)


def pfnet_prepare_params(w0, b0, w1, b1):
    """One-time padding + bf16 cast of the weights (hoisted out of the hot path).

    w0: (dim_z, dim_h); b0: (1, dim_h) or (dim_h,);
    w1: (dim_h, dim_img); b1: (1, dim_img) or (dim_img,).
    Padding is exact: padded b0 = 0 -> ReLU(0) = 0; zero W1 rows/cols add 0.
    """
    dim_z, dim_h = w0.shape
    dim_img = w1.shape[1]

    # Hidden dim: only pad to the bf16 sublane multiple (16), not 128.
    dim_hp = max(16, _round_up(dim_h, 16))
    # Output dim: lane-dense multiple of 128; column-tile when large (v7x VMEM).
    dim_ip = max(128, _round_up(dim_img, 128))
    if dim_ip > 2048:
        tn = 2048
        dim_ip = _round_up(dim_ip, tn)
    else:
        tn = dim_ip

    w0p = jnp.zeros((dim_z, dim_hp), jnp.bfloat16)
    w0p = w0p.at[:, :dim_h].set(w0.astype(jnp.bfloat16))
    b0p = jnp.zeros((1, dim_hp), jnp.float32)
    b0p = b0p.at[:, :dim_h].set(jnp.reshape(b0, (1, dim_h)).astype(jnp.float32))
    w1p = jnp.zeros((dim_hp, dim_ip), jnp.bfloat16)
    w1p = w1p.at[:dim_h, :dim_img].set(w1.astype(jnp.bfloat16))
    b1p = jnp.zeros((1, dim_ip), jnp.float32)
    b1p = b1p.at[:, :dim_img].set(jnp.reshape(b1, (1, dim_img)).astype(jnp.float32))

    return dict(w0=w0p, b0=b0p, w1=w1p, b1=b1p,
                dim_z=dim_z, dim_h=dim_h, dim_img=dim_img,
                dim_hp=dim_hp, dim_ip=dim_ip, tn=tn)


def pfnet_forward(z, params, *, tm=None, out_dtype=jnp.float32):
    """z: (N, dim_z); params from pfnet_prepare_params -> (N, dim_img).

    out_dtype=jnp.bfloat16 halves HBM writeback (the dominant traffic) when
    the consumer tolerates it; default f32 matches the PyTorch module.
    """
    N, dim_z = z.shape
    assert dim_z == params["dim_z"]
    dim_hp, dim_ip, tn = params["dim_hp"], params["dim_ip"], params["tn"]
    dim_img = params["dim_img"]
    out_bytes = jnp.dtype(out_dtype).itemsize

    # Batch-tile-dependent VMEM per row (double-buffered z/out + h/y temps).
    per_row_bytes = (2 * dim_z * 4          # z tiles (f32)
                     + 2 * tn * out_bytes   # out tiles
                     + tn * 4               # y intermediate (f32)
                     + dim_hp * 6)          # h intermediate (f32 + bf16 copy)

    # Batch tile: big enough to amortize ~0.35 us/step overhead, >= 4 grid
    # steps so both v7x TensorCores get work, and VMEM-budget capped (v7x 64 MiB).
    if tm is None:
        budget = 24 * 2**20
        tm_cap = max(8, (budget // per_row_bytes) // 8 * 8)
        tm = min(2048, tm_cap, max(8, _round_up(pl.cdiv(N, 4), 8)))
    tm = max(8, _round_up(int(tm), 8))

    # Pad batch so the grid covers it; extra rows are discarded afterwards.
    Np = _round_up(N, tm)
    zf = z.astype(jnp.float32)
    if Np != N:
        zf = jnp.zeros((Np, dim_z), jnp.float32).at[:N].set(zf)

    grid = (Np // tm, dim_ip // tn)

    weights_bytes = 2 * (dim_z * dim_hp * 2 + dim_hp * 4
                         + dim_hp * tn * 2 + tn * 4)
    vmem_est = tm * per_row_bytes + weights_bytes
    vmem_limit = int(min(64 * 2**20, max(16 * 2**20, 2 * vmem_est)))

    cost = pl.CostEstimate(
        flops=2 * Np * (dim_z * dim_hp + dim_hp * dim_ip),
        transcendentals=Np * dim_ip,                       # one tanh per element
        bytes_accessed=(Np * dim_z * 4
                        + dim_z * dim_hp * 2 + dim_hp * 4
                        + dim_hp * dim_ip * 2 + dim_ip * 4
                        + Np * dim_ip * out_bytes),
    )

    out = pl.pallas_call(
        pfnet_kernel,
        out_shape=jax.ShapeDtypeStruct((Np, dim_ip), out_dtype),
        grid_spec=pltpu.PrefetchScalarGridSpec(
            num_scalar_prefetch=0,
            grid=grid,
            in_specs=[
                pl.BlockSpec((tm, dim_z), lambda i, j: (i, 0)),      # z tile (f32)
                pl.BlockSpec((dim_z, dim_hp), lambda i, j: (0, 0)),  # W0 (resident)
                pl.BlockSpec((1, dim_hp), lambda i, j: (0, 0)),      # b0
                pl.BlockSpec((dim_hp, tn), lambda i, j: (0, j)),     # W1 column block
                pl.BlockSpec((1, tn), lambda i, j: (0, j)),          # b1 column block
            ],
            out_specs=pl.BlockSpec((tm, tn), lambda i, j: (i, j)),
        ),
        compiler_params=pltpu.CompilerParams(
            dimension_semantics=("parallel", "parallel"),
            vmem_limit_bytes=vmem_limit,
        ),
        cost_estimate=cost,
    )(zf, params["w0"], params["b0"], params["w1"], params["b1"])

    return out[:N, :dim_img]


def pfnet_reference_f32(z, w0, b0, w1, b1):
    """Exact f32 reference (original module semantics)."""
    h = jnp.maximum(z @ w0 + b0, 0.0)
    return jax.nn.sigmoid(h @ w1 + b1)


def pfnet_reference_bf16(z, w0, b0, w1, b1):
    """Reference mirroring the kernel's bf16 matmul inputs (f32 accumulate)."""
    rd = lambda x: x.astype(jnp.bfloat16).astype(jnp.float32)
    h = jnp.maximum(rd(z) @ rd(w0) + b0, 0.0)
    return jax.nn.sigmoid(rd(h) @ rd(w1) + b1)


if __name__ == "__main__":
    # Small shapes consistent with the module: dim_z=16 -> dim_h=32, dim_img=256.
    N, dim_z, dim_img = 64, 16, 256
    dim_h = 2 * dim_z

    key = jax.random.PRNGKey(0)
    kz, k0, kb0, k1, kb1 = jax.random.split(key, 5)

    z = jax.random.normal(kz, (N, dim_z), dtype=jnp.float32)
    # Deterministic parameter init (PyTorch Linear-like uniform scaling).
    w0 = jax.random.uniform(k0, (dim_z, dim_h), jnp.float32,
                            minval=-1.0, maxval=1.0) / jnp.sqrt(dim_z)
    b0 = jax.random.uniform(kb0, (1, dim_h), jnp.float32,
                            minval=-1.0, maxval=1.0) / jnp.sqrt(dim_z)
    w1 = jax.random.uniform(k1, (dim_h, dim_img), jnp.float32,
                            minval=-1.0, maxval=1.0) / jnp.sqrt(dim_h)
    b1 = jax.random.uniform(kb1, (1, dim_img), jnp.float32,
                            minval=-1.0, maxval=1.0) / jnp.sqrt(dim_h)

    # Padding / bf16 cast done ONCE (hoisted out of the per-call hot path).
    params = pfnet_prepare_params(w0, b0, w1, b1)

    out = pfnet_forward(z, params)
    out = jax.block_until_ready(out)
    assert out.shape == (N, dim_img)

    # Tight check vs a reference that mirrors the kernel's bf16 matmul inputs
    # (sigmoid is now exact: tanh identity, no approximate reciprocal).
    ref_bf16 = pfnet_reference_bf16(z, w0, b0, w1, b1)
    assert jnp.allclose(out, ref_bf16, atol=5e-3, rtol=5e-3), \
        "mismatch vs bf16-mirrored reference"

    # Semantic check vs the exact f32 module math (bf16 rounding only).
    ref_f32 = pfnet_reference_f32(z, w0, b0, w1, b1)
    assert jnp.allclose(out, ref_f32, atol=2e-2, rtol=2e-2), \
        "mismatch vs f32 reference"

    print("KERNEL_OK")
</pallas_src>

<mosaic_0001>
module attributes {stable_mosaic.version = 11 : i64} {
  func.func @pfnet_kernel(%arg0: i32, %arg1: i32, %arg2: memref<16x16xf32, #tpu.memory_space<vmem>>, %arg3: memref<16x32xbf16, #tpu.memory_space<vmem>>, %arg4: memref<1x32xf32, #tpu.memory_space<vmem>>, %arg5: memref<32x256xbf16, #tpu.memory_space<vmem>>, %arg6: memref<1x256xf32, #tpu.memory_space<vmem>>, %arg7: memref<16x256xf32, #tpu.memory_space<vmem>>) attributes {dimension_semantics = [#tpu.dimension_semantics<parallel>, #tpu.dimension_semantics<parallel>], iteration_bounds = array<i64: 4, 1>, scalar_prefetch = 0 : i64, scratch_operands = 0 : i64, tpu.core_type = #tpu.core_type<tc>, window_params = [{transform_indices = @transform_0, window_bounds = array<i64: 16, 16>}, {pipeline_mode = #tpu.pipeline_mode<synchronous>, transform_indices = @transform_1, window_bounds = array<i64: 16, 32>}, {pipeline_mode = #tpu.pipeline_mode<synchronous>, transform_indices = @transform_2, window_bounds = array<i64: 1, 32>}, {transform_indices = @transform_3, window_bounds = array<i64: 32, 256>}, {transform_indices = @transform_4, window_bounds = array<i64: 1, 256>}, {transform_indices = @transform_5, window_bounds = array<i64: 16, 256>}]} {
    %c0 = arith.constant 0 : index
    %c0_0 = arith.constant 0 : index
    %0 = vector.load %arg2[%c0, %c0_0] : memref<16x16xf32, #tpu.memory_space<vmem>>, vector<16x16xf32>
    %1 = arith.truncf %0 : vector<16x16xf32> to vector<16x16xbf16>
    %c0_1 = arith.constant 0 : index
    %c0_2 = arith.constant 0 : index
    %2 = vector.load %arg3[%c0_1, %c0_2] : memref<16x32xbf16, #tpu.memory_space<vmem>>, vector<16x32xbf16>
    %cst = arith.constant dense<0.000000e+00> : vector<16x32xf32>
    %3 = tpu.matmul %1, %2, %cst {dimension_numbers = #tpu.dot_dimension_numbers<[1], [0], [0], [1], [0, 0, 1, 1], [], []>} : vector<16x16xbf16>, vector<16x32xbf16>, vector<16x32xf32> -> vector<16x32xf32>
    %c0_3 = arith.constant 0 : index
    %c0_4 = arith.constant 0 : index
    %4 = vector.load %arg4[%c0_3, %c0_4] : memref<1x32xf32, #tpu.memory_space<vmem>>, vector<1x32xf32>
    %5 = vector.broadcast %4 : vector<1x32xf32> to vector<16x32xf32>
    %6 = arith.addf %3, %5 : vector<16x32xf32>
    %cst_5 = arith.constant 0.000000e+00 : f32
    %7 = vector.broadcast %cst_5 : f32 to vector<16x32xf32>
    %8 = arith.maximumf %6, %7 : vector<16x32xf32>
    %9 = arith.truncf %8 : vector<16x32xf32> to vector<16x32xbf16>
    %c0_6 = arith.constant 0 : index
    %c0_7 = arith.constant 0 : index
    %10 = vector.load %arg5[%c0_6, %c0_7] : memref<32x256xbf16, #tpu.memory_space<vmem>>, vector<32x256xbf16>
    %cst_8 = arith.constant dense<0.000000e+00> : vector<16x256xf32>
    %11 = tpu.matmul %9, %10, %cst_8 {dimension_numbers = #tpu.dot_dimension_numbers<[1], [0], [0], [1], [0, 0, 1, 1], [], []>} : vector<16x32xbf16>, vector<32x256xbf16>, vector<16x256xf32> -> vector<16x256xf32>
    %c0_9 = arith.constant 0 : index
    %c0_10 = arith.constant 0 : index
    %12 = vector.load %arg6[%c0_9, %c0_10] : memref<1x256xf32, #tpu.memory_space<vmem>>, vector<1x256xf32>
    %13 = vector.broadcast %12 : vector<1x256xf32> to vector<16x256xf32>
    %14 = arith.addf %11, %13 : vector<16x256xf32>
    %cst_11 = arith.constant 5.000000e-01 : f32
    %15 = vector.broadcast %cst_11 : f32 to vector<16x256xf32>
    %16 = arith.mulf %15, %14 : vector<16x256xf32>
    %17 = math.tanh %16 : vector<16x256xf32>
    %cst_12 = arith.constant 5.000000e-01 : f32
    %18 = vector.broadcast %cst_12 : f32 to vector<16x256xf32>
    %19 = arith.mulf %18, %17 : vector<16x256xf32>
    %cst_13 = arith.constant 5.000000e-01 : f32
    %20 = vector.broadcast %cst_13 : f32 to vector<16x256xf32>
    %21 = arith.addf %20, %19 : vector<16x256xf32>
    %c0_14 = arith.constant 0 : index
    %c0_15 = arith.constant 0 : index
    %22 = vector.load %arg7[%c0_14, %c0_15] : memref<16x256xf32, #tpu.memory_space<vmem>>, vector<16x256xf32>
    tpu.vector_store %arg7[%c0_14, %c0_15], %21 {strides = array<i32>} : memref<16x256xf32, #tpu.memory_space<vmem>>, vector<16x256xf32>,
    return
  }
  func.func @transform_0(%arg0: i32, %arg1: i32) -> (i32, i32) {
    %c0_i32 = arith.constant 0 : i32
    %c0_i32_0 = arith.constant 0 : i32
    return %arg0, %c0_i32 : i32, i32
  }
  func.func @transform_1(%arg0: i32, %arg1: i32) -> (i32, i32) {
    %c0_i32 = arith.constant 0 : i32
    %c0_i32_0 = arith.constant 0 : i32
    %c0_i32_1 = arith.constant 0 : i32
    return %c0_i32, %c0_i32_0 : i32, i32
  }
  func.func @transform_2(%arg0: i32, %arg1: i32) -> (i32, i32) {
    %c0_i32 = arith.constant 0 : i32
    %c0_i32_0 = arith.constant 0 : i32
    %c0_i32_1 = arith.constant 0 : i32
    return %c0_i32, %c0_i32_0 : i32, i32
  }
  func.func @transform_3(%arg0: i32, %arg1: i32) -> (i32, i32) {
    %c0_i32 = arith.constant 0 : i32
    %c0_i32_0 = arith.constant 0 : i32
    return %c0_i32, %arg1 : i32, i32
  }
  func.func @transform_4(%arg0: i32, %arg1: i32) -> (i32, i32) {
    %c0_i32 = arith.constant 0 : i32
    %c0_i32_0 = arith.constant 0 : i32
    return %c0_i32, %arg1 : i32, i32
  }
  func.func @transform_5(%arg0: i32, %arg1: i32) -> (i32, i32) {
    %c0_i32 = arith.constant 0 : i32
    return %arg0, %arg1 : i32, i32
  }
}

</mosaic_0001>

<llo_original>
// kernel: tpu_custom_call.1
$region0: #{tpu_custom_call.1}
  #allocation0 [shape = 'u32[]', space=smem, size = 0x4, offset = 0x4, fixed_abs, tag = 'smem constant byte address 0x4 - core index']
  #allocation1 [shape = 'u32[144,128]{1,0:T(1,128)}', space=vmem, size = 0x12000, scoped, tag = 'internal scratch']
  %s0 = inlined_call_operand.vmem [shape: f32[64,16], index: 0, kind: input, shape index: {}]
  %s1 = inlined_call_operand.vmem [shape: bf16[16,32], index: 1, kind: input, shape index: {}]
  %s2 = inlined_call_operand.vmem [shape: f32[1,32], index: 2, kind: input, shape index: {}]
  %s3 = inlined_call_operand.vmem [shape: bf16[32,256], index: 3, kind: input, shape index: {}]
  %s4 = inlined_call_operand.vmem [shape: f32[1,256], index: 4, kind: input, shape index: {}]
  %s5 = inlined_call_operand.hbm [shape: f32[64,256], index: 5, kind: output, shape index: {}]
  %s6 = sld [smem:[#allocation0]]
  $region53: #{tpu_custom_call.1} parent=0
    _
  %s8 = ssub.s32 1, %s6
  %s9 = scalar_select 0, %s8, %s6
  $region1: #{tpu_custom_call.1} parent=0
    #allocation2 [shape = 'u8[32768]{0}', space=vmem, size = 0x8000, scoped, tag = 'output window, operand 0']
    #allocation3 [shape = 's32[2]{0}', space=sflag, size = 0x8, scoped, tag = 'scoped memory for tpu_custom_call.1']
    %10 = vsyncpa [#allocation3], 0
    %s11 = scalar_lea.sflag [#allocation3], 1
    %12 = vsyncpa %s11, 0
    loop: start=0, step=1, limit=6
    $region2: #{tpu_custom_call.1} parent=1 // loop_pre_header
      _
    $region3: #{tpu_custom_call.1} parent=1 // loop_header
      %s14 = sphi 0, %s18
      %p15 = scmp.ge.s32.totalorder %s14, 6
      %s21 = sphi 0, %s33
      %s22 = sphi 0, %s29
      %s23 = sphi 0, %s21
      %s24 = sphi 0, %s22
      %s25 = sphi 0, %s23
      %s26 = sphi 0, %s24
      %s36 = sphi 0, %s38
      %s39 = sphi 0, %s36
      %s40 = sphi 0, %s39
      %s56 = sphi 0, %s40
      %s60 = sphi 0, %s60
      %s62 = sphi 0, %s60
      %s63 = sphi 0, %s62
      %s77 = sphi 0, %s63
      %s81 = sphi 0, %s81
      %s83 = sphi 0, %s81
      %s84 = sphi 0, %s83
      %s98 = sphi 0, %s84
      %s104 = sphi 0, %s106
      %s107 = sphi 0, %s104
      %s108 = sphi 0, %s107
      %s124 = sphi 0, %s108
      %s130 = sphi 0, %s132
      %s133 = sphi 0, %s130
      %s134 = sphi 0, %s133
      %s150 = sphi 0, %s134
      %s158 = sphi 0, %s160
      %s161 = sphi 0, %s158
      %s162 = sphi 0, %s161
      %s178 = sphi 0, %s162
    $region4: #{tpu_custom_call.1} parent=1 // loop_header_branch
      %17 = sbr.rel (%p15) target = $region8
    $region5: #{tpu_custom_call.1} parent=1 // loop_body
      %s19 = ssub.s32 %s14, 1
      %s20 = ssub.s32 %s14, 2
      %s27 = sadd.s32 1, %s22
      %p28 = scmp.ge.s32.totalorder %s27, 1
      %s29 = scalar_select %p28, 0, %s27
      %s30 = sadd.s32 1, %s21
      %s31 = scalar_select %p28, %s30, %s21
      %p32 = scmp.ge.s32.totalorder %s31, 4
      %s33 = scalar_select %p32, 0, %s31
      %s34 = ssub.s32 %s21, %s33
      %p35 = scmp.eq.s32.totalorder %s34, 0
      %s37 = sadd.s32 %s36, 1
      %s38 = scalar_select %p35, %s36, %s37
      %p41 = pneg %p35
      %p42 = scmp.eq.s32.totalorder %s14, 3
      %p43 = por %p41, %p42
      %p44 = scmp.ne.s32.totalorder %s36, %s39
      %p45 = scmp.eq.s32.totalorder %s14, 0
      %p46 = por %p44, %p45
      %p47 = scmp.ne.s32.totalorder %s36, %s39
      %p48 = scmp.eq.s32.totalorder %s19, 3
      %p49 = por %p47, %p48
      %p50 = scmp.ne.s32.totalorder %s39, %s40
      %p51 = scmp.eq.s32.totalorder %s19, 0
      %p52 = por %p50, %p51
      %p53 = scmp.ne.s32.totalorder %s39, %s40
      %p54 = scmp.eq.s32.totalorder %s20, 3
      %p55 = por %p53, %p54
      %p57 = scmp.ne.s32.totalorder %s40, %s56
      %p58 = scmp.eq.s32.totalorder %s20, 0
      %p59 = por %p57, %p58
      %s61 = sadd.s32 %s60, 1
      %p64 = scmp.eq.s32.totalorder %s14, 3
      %p65 = scmp.ne.s32.totalorder %s60, %s62
      %p66 = scmp.eq.s32.totalorder %s14, 0
      %p67 = por %p65, %p66
      %p68 = scmp.ne.s32.totalorder %s60, %s62
      %p69 = scmp.eq.s32.totalorder %s19, 3
      %p70 = por %p68, %p69
      %p71 = scmp.ne.s32.totalorder %s62, %s63
      %p72 = scmp.eq.s32.totalorder %s19, 0
      %p73 = por %p71, %p72
      %p74 = scmp.ne.s32.totalorder %s62, %s63
      %p75 = scmp.eq.s32.totalorder %s20, 3
      %p76 = por %p74, %p75
      %p78 = scmp.ne.s32.totalorder %s63, %s77
      %p79 = scmp.eq.s32.totalorder %s20, 0
      %p80 = por %p78, %p79
      %s82 = sadd.s32 %s81, 1
      %p85 = scmp.eq.s32.totalorder %s14, 3
      %p86 = scmp.ne.s32.totalorder %s81, %s83
      %p87 = scmp.eq.s32.totalorder %s14, 0
      %p88 = por %p86, %p87
      %p89 = scmp.ne.s32.totalorder %s81, %s83
      %p90 = scmp.eq.s32.totalorder %s19, 3
      %p91 = por %p89, %p90
      %p92 = scmp.ne.s32.totalorder %s83, %s84
      %p93 = scmp.eq.s32.totalorder %s19, 0
      %p94 = por %p92, %p93
      %p95 = scmp.ne.s32.totalorder %s83, %s84
      %p96 = scmp.eq.s32.totalorder %s20, 3
      %p97 = por %p95, %p96
      %p99 = scmp.ne.s32.totalorder %s84, %s98
      %p100 = scmp.eq.s32.totalorder %s20, 0
      %p101 = por %p99, %p100
      %s102 = ssub.s32 %s22, %s29
      %p103 = scmp.eq.s32.totalorder %s102, 0
      %s105 = sadd.s32 %s104, 1
      %s106 = scalar_select %p103, %s104, %s105
      %p109 = pneg %p103
      %p110 = scmp.eq.s32.totalorder %s14, 3
      %p111 = por %p109, %p110
      %p112 = scmp.ne.s32.totalorder %s104, %s107
      %p113 = scmp.eq.s32.totalorder %s14, 0
      %p114 = por %p112, %p113
      %p115 = scmp.ne.s32.totalorder %s104, %s107
      %p116 = scmp.eq.s32.totalorder %s19, 3
      %p117 = por %p115, %p116
      %p118 = scmp.ne.s32.totalorder %s107, %s108
      %p119 = scmp.eq.s32.totalorder %s19, 0
      %p120 = por %p118, %p119
      %p121 = scmp.ne.s32.totalorder %s107, %s108
      %p122 = scmp.eq.s32.totalorder %s20, 3
      %p123 = por %p121, %p122
      %p125 = scmp.ne.s32.totalorder %s108, %s124
      %p126 = scmp.eq.s32.totalorder %s20, 0
      %p127 = por %p125, %p126
      %s128 = ssub.s32 %s22, %s29
      %p129 = scmp.eq.s32.totalorder %s128, 0
      %s131 = sadd.s32 %s130, 1
      %s132 = scalar_select %p129, %s130, %s131
      %p135 = pneg %p129
      %p136 = scmp.eq.s32.totalorder %s14, 3
      %p137 = por %p135, %p136
      %p138 = scmp.ne.s32.totalorder %s130, %s133
      %p139 = scmp.eq.s32.totalorder %s14, 0
      %p140 = por %p138, %p139
      %p141 = scmp.ne.s32.totalorder %s130, %s133
      %p142 = scmp.eq.s32.totalorder %s19, 3
      %p143 = por %p141, %p142
      %p144 = scmp.ne.s32.totalorder %s133, %s134
      %p145 = scmp.eq.s32.totalorder %s19, 0
      %p146 = por %p144, %p145
      %p147 = scmp.ne.s32.totalorder %s133, %s134
      %p148 = scmp.eq.s32.totalorder %s20, 3
      %p149 = por %p147, %p148
      %p151 = scmp.ne.s32.totalorder %s134, %s150
      %p152 = scmp.eq.s32.totalorder %s20, 0
      %p153 = por %p151, %p152
      %s154 = ssub.s32 %s21, %s33
      %s155 = ssub.s32 %s22, %s29
      %s156 = sor.u32 %s154, %s155
      %p157 = scmp.eq.s32.totalorder %s156, 0
      %s159 = sadd.s32 %s158, 1
      %s160 = scalar_select %p157, %s158, %s159
      %p163 = pneg %p157
      %p164 = scmp.eq.s32.totalorder %s14, 3
      %p165 = por %p163, %p164
      %p166 = scmp.ne.s32.totalorder %s158, %s161
      %p167 = scmp.eq.s32.totalorder %s14, 0
      %p168 = por %p166, %p167
      %p169 = scmp.ne.s32.totalorder %s158, %s161
      %p170 = scmp.eq.s32.totalorder %s19, 3
      %p171 = por %p169, %p170
      %p172 = scmp.ne.s32.totalorder %s161, %s162
      %p173 = scmp.eq.s32.totalorder %s19, 0
      %p174 = por %p172, %p173
      %p175 = scmp.ne.s32.totalorder %s161, %s162
      %p176 = scmp.eq.s32.totalorder %s20, 3
      %p177 = por %p175, %p176
      %p179 = scmp.ne.s32.totalorder %s162, %s178
      %p180 = scmp.eq.s32.totalorder %s20, 0
      %p181 = por %p179, %p180
      %p182 = scmp.le.s32.totalorder 1, %s14
      %p183 = scmp.lt.s32.totalorder %s14, 5
      %p184 = pnand %p182, %p183
      %p185 = pneg %p184
      // Predicated region
      $region9: #{tpu_custom_call.1} parent=5 // pred_check
        _
      $region10: #{tpu_custom_call.1} parent=5 // pred_check_branch
        %187 = sbr.rel (%p184) target = $region12
      $region11: #{tpu_custom_call.1} parent=5 // pred_region
        %s188 = ssub.s32 %s14, 1
        // Predicated region
        $region13: #{tpu_custom_call.1} parent=11 // pred_check
          %p189 = pneg %p73
        $region14: #{tpu_custom_call.1} parent=11 // pred_check_branch
          %191 = sbr.rel (%p189) target = $region16
        $region15: #{tpu_custom_call.1} parent=11 // pred_region
          _
        $region16: #{tpu_custom_call.1} parent=11 // pred_fallthru
          _
        // Predicated region
        $region17: #{tpu_custom_call.1} parent=11 // pred_check
          %p192 = pneg %p94
        $region18: #{tpu_custom_call.1} parent=11 // pred_check_branch
          %194 = sbr.rel (%p192) target = $region20
        $region19: #{tpu_custom_call.1} parent=11 // pred_region
          _
        $region20: #{tpu_custom_call.1} parent=11 // pred_fallthru
          _
        // Predicated region
        $region21: #{tpu_custom_call.1} parent=11 // pred_check
          %p195 = pneg %p120
        $region22: #{tpu_custom_call.1} parent=11 // pred_check_branch
          %197 = sbr.rel (%p195) target = $region24
        $region23: #{tpu_custom_call.1} parent=11 // pred_region
          %s198 = smul.u32 2, %s24
          %p199 = scmp.lt.s32.totalorder %s198, 1
          %s200 = scalar_select %p199, %s198, 1
          %s201 = smul.addr %s200, 4
          %s202 = scalar_lea.vmem %s3, %s201
          %s203 = smul.u32 2, %s24
        $region24: #{tpu_custom_call.1} parent=11 // pred_fallthru
          _
        // Predicated region
        $region25: #{tpu_custom_call.1} parent=11 // pred_check
          %p204 = pneg %p146
        $region26: #{tpu_custom_call.1} parent=11 // pred_check_branch
          %206 = sbr.rel (%p204) target = $region28
        $region27: #{tpu_custom_call.1} parent=11 // pred_region
          %s207 = smul.u32 2, %s24
          %p208 = scmp.lt.s32.totalorder %s207, 1
          %s209 = scalar_select %p208, %s207, 1
          %s210 = scalar_lea.vmem %s4, %s209
          %s211 = smul.u32 2, %s24
        $region28: #{tpu_custom_call.1} parent=11 // pred_fallthru
          _
      $region12: #{tpu_custom_call.1} parent=5 // pred_fallthru
        _
      %p212 = scmp.lt.s32.totalorder %s14, 4
      // Predicated region
      $region29: #{tpu_custom_call.1} parent=5 // pred_check
        %p213 = pneg %p212
      $region30: #{tpu_custom_call.1} parent=5 // pred_check_branch
        %215 = sbr.rel (%p213) target = $region32
      $region31: #{tpu_custom_call.1} parent=5 // pred_region
        // Predicated region
        $region33: #{tpu_custom_call.1} parent=31 // pred_check
          %p216 = pneg %p46
        $region34: #{tpu_custom_call.1} parent=31 // pred_check_branch
          %218 = sbr.rel (%p216) target = $region36
        $region35: #{tpu_custom_call.1} parent=31 // pred_region
          %s219 = smul.u32 2, %s21
          %p220 = scmp.lt.s32.totalorder %s219, 7
          %s221 = scalar_select %p220, %s219, 7
          %s222 = smul.addr %s221, 8
          %s223 = scalar_lea.vmem %s0, %s222
          %s224 = smul.u32 2, %s21
        $region36: #{tpu_custom_call.1} parent=31 // pred_fallthru
          _
      $region32: #{tpu_custom_call.1} parent=5 // pred_fallthru
        _
      %p225 = scmp.le.s32.totalorder 1, %s14
      %p226 = scmp.lt.s32.totalorder %s14, 5
      %p227 = pnand %p225, %p226
      %p228 = pneg %p227
      // Predicated region
      $region37: #{tpu_custom_call.1} parent=5 // pred_check
        _
      $region38: #{tpu_custom_call.1} parent=5 // pred_check_branch
        %230 = sbr.rel (%p227) target = $region40
      $region39: #{tpu_custom_call.1} parent=5 // pred_region
        %s231 = ssub.s32 %s14, 1
        %s232 = smul.u32 2, %s23
        %p233 = scmp.lt.s32.totalorder %s232, 7
        %s234 = scalar_select %p233, %s232, 7
        %s235 = smul.addr %s234, 8
        %s236 = scalar_lea.vmem %s0, %s235
        %p237 = pneg %p52
        %p238 = pneg %p49
        %p239 = pneg %p73
        %p240 = pneg %p70
        %p241 = pneg %p94
        %p242 = pneg %p91
        %s243 = smul.u32 2, %s24
        %p244 = scmp.lt.s32.totalorder %s243, 1
        %s245 = scalar_select %p244, %s243, 1
        %s246 = smul.addr %s245, 4
        %s247 = scalar_lea.vmem %s3, %s246
        %p248 = pneg %p120
        %p249 = pneg %p117
        %s250 = smul.u32 2, %s24
        %p251 = scmp.lt.s32.totalorder %s250, 1
        %s252 = scalar_select %p251, %s250, 1
        %s253 = scalar_lea.vmem %s4, %s252
        %p254 = pneg %p146
        %p255 = pneg %p143
        %p256 = pneg %p174
        %p257 = pneg %p171
        %s258 = sand.u32 %s161, 1
        %s259 = scalar_lea.sflag [#allocation3], %s258
        %s260 = sand.u32 %s161, 1
        %s261 = smul.addr %s260, 32
        %s262 = scalar_lea.vmem [#allocation2], %s261
        %s263 = smul.u32 2, %s23
        %p264 = scmp.lt.s32.totalorder %s263, 7
        %s265 = scalar_select %p264, %s263, 7
        %s266 = smul.addr %s265, 8
        %s267 = scalar_lea.vmem %s0, %s266
        %s268 = smul.u32 2, %s23
        %s269 = smul.u32 2, %s24
        %p270 = scmp.lt.s32.totalorder %s269, 1
        %s271 = scalar_select %p270, %s269, 1
        %s272 = smul.addr %s271, 4
        %s273 = scalar_lea.vmem %s3, %s272
        %s274 = smul.u32 2, %s24
        %s275 = smul.u32 2, %s24
        %p276 = scmp.lt.s32.totalorder %s275, 1
        %s277 = scalar_select %p276, %s275, 1
        %s278 = scalar_lea.vmem %s4, %s277
        %s279 = smul.u32 2, %s24
        %s280 = smul.u32 2, %s23
        %s281 = smul.u32 2, %s24
        %v283 = vld [vmem:[%s267] sm:$0xff]
        %v284 = vld [vmem:[%s267 + $0x8] sm:$0xff]
        %v285 = vpack.c.bf16 %v284, %v283
        %v286 = vld [vmem:[%s1] sm:$0xf]
        %v287 = vld [vmem:[%s1 + $0x4] sm:$0xf]
        %v288 = vld [vmem:[%s2] sm:$0x1]
        %v290 = vlaneseq
        %v291 = vshrl.u32 %v290, 7
        %v292 = vsub.s32 0, %v291
        %v293 = vrot.slane %v288, %v292
        %v297 = vunpack.c.l.b16 %v286
        %v298 = vunpack.c.l.b16 %v287
        %v299 = vpack.c.b16 %v298, %v297
        %vm301 = vcmask 130048
        %v303 = vsel %vm301, %v285, 0
        %305 = vmatprep.subr.bf16.mxu0 0
        %306 = vmatpush1.bf16.msra.mxu0 0
        %307 = vmatprep.subr.bf16.mxu0 0
        %308 = vmatpush1.bf16.msra.mxu0 0
        %309 = vmatprep.subr.bf16.mxu0 0
        %310 = vmatpush1.bf16.msra.mxu0 0
        %311 = vmatprep.subr.bf16.mxu0 0
        %312 = vmatpush1.bf16.msra.mxu0 0
        %313 = vmatprep.subr.bf16.mxu0 0
        %314 = vmatpush1.bf16.msra.mxu0 0
        %315 = vmatprep.subr.bf16.mxu0 0
        %316 = vmatpush1.bf16.msra.mxu0 0
        %317 = vmatprep.subr.bf16.mxu0 0
        %318 = vmatpush1.bf16.msra.mxu0 0
        %319 = vmatprep.subr.bf16.mxu0 0
        %320 = vmatpush1.bf16.msra.mxu0 %v299
        %321 = vmatprep.subr.bf16.mxu0 0
        %322 = vmatpush2.bf16.msra.mxu0 0
        %323 = vmatprep.subr.bf16.mxu0 0
        %324 = vmatpush2.bf16.msra.mxu0 0
        %325 = vmatprep.subr.bf16.mxu0 0
        %326 = vmatpush2.bf16.msra.mxu0 0
        %327 = vmatprep.subr.bf16.mxu0 0
        %328 = vmatpush2.bf16.msra.mxu0 0
        %329 = vmatprep.subr.bf16.mxu0 0
        %330 = vmatpush2.bf16.msra.mxu0 0
        %331 = vmatprep.subr.bf16.mxu0 0
        %332 = vmatpush2.bf16.msra.mxu0 0
        %333 = vmatprep.subr.bf16.mxu0 0
        %334 = vmatpush2.bf16.msra.mxu0 0
        %335 = vmatprep.subr.bf16.mxu0 0
        %336 = vmatpush2.bf16.msra.mxu0 0
        %337 = vmatprep.mubr.bf16.mxu0 0
        %338 = vmatmul.mubr.bf16.gmra.mxu0 %v303
        %v339 = vpop.f32.mrf.mxu0
        %v340 = vadd.f32 %v293, %v339
        %v341 = vpop.f32.mrf.mxu0
        %v342 = vpop.f32.mrf.mxu0
        %v343 = vadd.f32 %v293, %v342
        %v344 = vpop.f32.mrf.mxu0
        %345 = vdwg.mxu0
        %v346 = vmax.f32 %v340, 0.0
        %v347 = vmax.f32 %v343, 0.0
        %v348 = vpack.c.bf16 %v347, %v346
        %v349 = vld [vmem:[%s273] sm:$0xff]
        %v350 = vld [vmem:[%s273 + $0x8] sm:$0xff]
        %v351 = vld [vmem:[%s273 + $0x10] sm:$0xff]
        %v352 = vld [vmem:[%s273 + $0x18] sm:$0xff]
        %v353 = vld [vmem:[%s278] sm:$0x3]
        %v355 = vlaneseq
        %v356 = vshrl.u32 %v355, 7
        %v357 = vsub.s32 0, %v356
        %v358 = vrot.slane %v353, %v357
        %v359 = vlaneseq
        %v360 = vshrl.u32 %v359, 7
        %v361 = vsub.s32 1, %v360
        %v362 = vrot.slane %v353, %v361
        %v369 = vunpack.c.l.b16 %v349
        %v370 = vunpack.c.h.b16 %v349
        %v371 = vunpack.c.l.b16 %v350
        %v372 = vunpack.c.h.b16 %v350
        %v373 = vunpack.c.l.b16 %v351
        %v374 = vunpack.c.h.b16 %v351
        %v375 = vunpack.c.l.b16 %v352
        %v376 = vunpack.c.h.b16 %v352
        %v377 = vpack.c.b16 %v371, %v369
        %v378 = vpack.c.b16 %v372, %v370
        %v379 = vpack.c.b16 %v375, %v373
        %v380 = vpack.c.b16 %v376, %v374
        %vm385 = vcmask 261120
        %v387 = vsel %vm385, %v348, 0
        %389 = vmatprep.subr.bf16.mxu0 0
        %390 = vmatpush1.bf16.msra.mxu0 0
        %391 = vmatprep.subr.bf16.mxu0 0
        %392 = vmatpush1.bf16.msra.mxu0 0
        %393 = vmatprep.subr.bf16.mxu0 0
        %394 = vmatpush1.bf16.msra.mxu0 0
        %395 = vmatprep.subr.bf16.mxu0 0
        %396 = vmatpush1.bf16.msra.mxu0 0
        %397 = vmatprep.subr.bf16.mxu0 0
        %398 = vmatpush1.bf16.msra.mxu0 0
        %399 = vmatprep.subr.bf16.mxu0 0
        %400 = vmatpush1.bf16.msra.mxu0 0
        %401 = vmatprep.subr.bf16.mxu0 %v380
        %402 = vmatpush1.bf16.msra.mxu0 %v379
        %403 = vmatprep.subr.bf16.mxu0 %v378
        %404 = vmatpush1.bf16.msra.mxu0 %v377
        %405 = vmatprep.subr.bf16.mxu0 0
        %406 = vmatpush2.bf16.msra.mxu0 0
        %407 = vmatprep.subr.bf16.mxu0 0
        %408 = vmatpush2.bf16.msra.mxu0 0
        %409 = vmatprep.subr.bf16.mxu0 0
        %410 = vmatpush2.bf16.msra.mxu0 0
        %411 = vmatprep.subr.bf16.mxu0 0
        %412 = vmatpush2.bf16.msra.mxu0 0
        %413 = vmatprep.subr.bf16.mxu0 0
        %414 = vmatpush2.bf16.msra.mxu0 0
        %415 = vmatprep.subr.bf16.mxu0 0
        %416 = vmatpush2.bf16.msra.mxu0 0
        %417 = vmatprep.subr.bf16.mxu0 0
        %418 = vmatpush2.bf16.msra.mxu0 0
        %419 = vmatprep.subr.bf16.mxu0 0
        %420 = vmatpush2.bf16.msra.mxu0 0
        %421 = vmatprep.mubr.bf16.mxu0 0
        %422 = vmatmul.mubr.bf16.gmra.mxu0 %v387
        %v423 = vpop.f32.mrf.mxu0
        %v424 = vadd.f32 %v358, %v423
        %v425 = vpop.f32.mrf.mxu0
        %v426 = vadd.f32 %v362, %v425
        %v427 = vpop.f32.mrf.mxu0
        %v428 = vadd.f32 %v358, %v427
        %v429 = vpop.f32.mrf.mxu0
        %v430 = vadd.f32 %v362, %v429
        %431 = vdwg.mxu0
        %v432 = vmul.f32 %v424, 0.5
        %v433 = vmul.f32 %v426, 0.5
        %v434 = vmul.f32 %v428, 0.5
        %v435 = vmul.f32 %v430, 0.5
        %v436 = vtanh.pop %v432
        %v437 = vtanh.pop %v433
        %v438 = vtanh.pop %v434
        %v439 = vtanh.pop %v435
        %v440 = vmul.f32 %v436, 0.5
        %v441 = vmul.f32 %v437, 0.5
        %v442 = vmul.f32 %v438, 0.5
        %v443 = vmul.f32 %v439, 0.5
        %v444 = vadd.f32 %v440, 0.5
        %v445 = vadd.f32 %v441, 0.5
        %v446 = vadd.f32 %v442, 0.5
        %v447 = vadd.f32 %v443, 0.5
        %448 = vst [vmem:[%s262] sm:$0xff] %v444
        %449 = vst [vmem:[%s262 + $0x8] sm:$0xff] %v445
        %450 = vst [vmem:[%s262 + $0x10] sm:$0xff] %v446
        %451 = vst [vmem:[%s262 + $0x18] sm:$0xff] %v447
        %s452 = sand.u32 %s161, 1
        %s453 = scalar_lea.sflag [#allocation3], %s452
        %s454 = sand.u32 %s161, 1
        %s455 = smul.addr %s454, 32
        %s456 = scalar_lea.vmem [#allocation2], %s455
        // Predicated region
        $region41: #{tpu_custom_call.1} parent=39 // pred_check
          %p457 = pneg %p171
        $region42: #{tpu_custom_call.1} parent=39 // pred_check_branch
          %459 = sbr.rel (%p457) target = $region44
        $region43: #{tpu_custom_call.1} parent=39 // pred_region
          %s460 = smul.u32 2, %s23
          %s461 = smul.u32 2, %s24
          %s463 = ssub.s32 512, 512
          %464 = vsyncadd %s453, %s463
          %s465 = smul.addr %s460, 2
          %s466 = sadd.s32 %s461, %s465
          %s467 = smul.addr %s466, 128
          %s468 = scalar_lea.hbm %s5, %s467
          %s469 = sshll.u32 %s456, 4
          %s470 = int_to_ptr.vmem [resolvable:$true] %s469
          %475 = dma.vmem_to_hbm [thread:$0]  %s470, 512, %s468, %s453, 256, 256, 16
        $region44: #{tpu_custom_call.1} parent=39 // pred_fallthru
          _
      $region40: #{tpu_custom_call.1} parent=5 // pred_fallthru
        _
      %p476 = scmp.le.s32.totalorder 2, %s14
      // Predicated region
      $region45: #{tpu_custom_call.1} parent=5 // pred_check
        %p477 = pneg %p476
      $region46: #{tpu_custom_call.1} parent=5 // pred_check_branch
        %479 = sbr.rel (%p477) target = $region48
      $region47: #{tpu_custom_call.1} parent=5 // pred_region
        %s480 = ssub.s32 %s14, 2
        // Predicated region
        $region49: #{tpu_custom_call.1} parent=47 // pred_check
          %p481 = pneg %p177
        $region50: #{tpu_custom_call.1} parent=47 // pred_check_branch
          %483 = sbr.rel (%p481) target = $region52
        $region51: #{tpu_custom_call.1} parent=47 // pred_region
          %s484 = sand.u32 %s162, 1
          %s485 = scalar_lea.sflag [#allocation3], %s484
          %s486 = sand.u32 %s162, 1
          %s487 = smul.addr %s486, 32
          %s488 = scalar_lea.vmem [#allocation2], %s487
          %489 = dma.done %s485, 512
        $region52: #{tpu_custom_call.1} parent=47 // pred_fallthru
          _
      $region48: #{tpu_custom_call.1} parent=5 // pred_fallthru
        _
    $region6: #{tpu_custom_call.1} parent=1 // loop_footer
      %s18 = sadd.s32 1, %s14
    $region7: #{tpu_custom_call.1} parent=1 // loop_footer_branch
      %13 = sbr.rel target = $region3
    $region8: #{tpu_custom_call.1} parent=1 // loop_exit
      _
    %490 = vsyncpa [#allocation3], 1
    %s491 = scalar_lea.sflag [#allocation3], 1
    %492 = vsyncpa %s491, 1

</llo_original>
